<compile_context>
chip_gen: v7x
topology: tpu7x:2x2x1
jax: 0.10.0
libtpu: 0.0.40
codegen_flags: <defaults>
</compile_context>

<pallas_src>
import jax
import jax.numpy as jnp
from jax.experimental import pallas as pl
from jax.experimental.pallas import tpu as pltpu


_LANE = 128


def _policy_kernel(xT_ref, w1_ref, b1_ref, w2_ref, b2_ref, outT_ref):
    # xT: (n_in, TB)   batch on lanes, features on sublanes
    # w1: (n_mid, n_in), b1: (n_mid, 1), w2: (n_out, n_mid), b2: (n_out, 1)
    # outT: (n_out, TB)
    xT = xT_ref[...]

    # ---- Layer 1 (MXU): h^T = relu(W1 @ x^T + b1) -> (n_mid, TB) ----
    h = jnp.dot(w1_ref[...], xT, preferred_element_type=jnp.float32)
    h = jnp.maximum(h + b1_ref[...], 0.0)

    # ---- Layer 2 (MXU): logits^T = W2 @ h^T + b2 -> (n_out, TB) ----
    logits = (jnp.dot(w2_ref[...], h, preferred_element_type=jnp.float32)
              + b2_ref[...])

    # ---- Softmax over the feature axis (PyTorch dim=1 == sublane axis) ----
    # Sublane reductions go through the XLU; exp goes to the EUP; the
    # normalization is an exact divide so rows sum to 1 to f32 precision.
    m = jnp.max(logits, axis=0, keepdims=True)        # (1, TB)
    e = jnp.exp(logits - m)                            # (n_out, TB)
    s = jnp.sum(e, axis=0, keepdims=True)              # (1, TB)
    outT_ref[...] = (e / s).astype(outT_ref.dtype)


def prepare_policy_params(w1, b1, w2, b2):
    """One-time parameter prep (hoisted out of the per-step hot path).

    PyTorch nn.Linear stores weights as (out_features, in_features), which is
    already the correct orientation for the batch-on-lanes formulation
    (h^T = W1 @ x^T), so only the biases need reshaping to column vectors.
    """
    return (jnp.asarray(w1),                    # (n_mid, n_in)
            jnp.asarray(b1).reshape(-1, 1),     # (n_mid, 1)
            jnp.asarray(w2),                    # (n_out, n_mid)
            jnp.asarray(b2).reshape(-1, 1))     # (n_out, 1)


def policy_forward(x, params, *, max_batch_tile=32768):
    """Policy forward pass as a single batched Pallas kernel.

    Args:
      x:      (B, n_in) float32 activations.
      params: output of `prepare_policy_params`.
      max_batch_tile: largest batch tile (lane-count) per grid step; rounded
        down to a multiple of 128 lanes.  Lane-dense blocks cost ~0.4 KB of
        VMEM per lane-column, so 32768 stays well inside every generation's
        scoped-VMEM budget while amortizing the ~0.35 us per-step overhead.
    Returns:
      (B, n_out) float32 action probabilities (rows sum to 1).
    """
    w1, b1_col, w2, b2_col = params
    B, n_in = x.shape
    n_mid = w1.shape[0]
    n_out = w2.shape[0]

    # Batch-on-lanes layout: present x transposed (wrapper layout plumbing).
    xT = x.T                                        # (n_in, B)

    mbt = max(_LANE, (max_batch_tile // _LANE) * _LANE)
    if B <= 2 * _LANE:
        # Tiny batch: one full block (legal: block dim == full array dim).
        TB, Bp = B, B
    else:
        # Guarantee >= 2 grid steps (v7x megacore) and TB multiple of 128.
        half = pl.cdiv(pl.cdiv(B, 2), _LANE) * _LANE
        TB = min(mbt, half)
        Bp = pl.cdiv(B, TB) * TB
        if Bp != B:
            xT = jnp.pad(xT, ((0, 0), (0, Bp - B)))

    grid = (Bp // TB,)

    cost = pl.CostEstimate(
        flops=2 * Bp * (n_in * n_mid + n_mid * n_out),
        transcendentals=Bp * n_out,
        bytes_accessed=4 * (Bp * (n_in + n_out)
                            + n_in * n_mid + n_mid * n_out + n_mid + n_out),
    )

    outT = pl.pallas_call(
        _policy_kernel,
        out_shape=jax.ShapeDtypeStruct((n_out, Bp), jnp.float32),
        grid=grid,
        in_specs=[
            # Streamed activation: blocked over the batch (lane) axis.
            pl.BlockSpec((n_in, TB), lambda i: (0, i)),
            # Parameters: grid-invariant full blocks, resident in VMEM.
            pl.BlockSpec((n_mid, n_in), lambda i: (0, 0)),
            pl.BlockSpec((n_mid, 1), lambda i: (0, 0)),
            pl.BlockSpec((n_out, n_mid), lambda i: (0, 0)),
            pl.BlockSpec((n_out, 1), lambda i: (0, 0)),
        ],
        out_specs=pl.BlockSpec((n_out, TB), lambda i: (0, i)),
        compiler_params=pltpu.CompilerParams(
            dimension_semantics=("parallel",),
            vmem_limit_bytes=32 * 1024 * 1024),
        cost_estimate=cost,
    )(xT, w1, b1_col, w2, b2_col)

    if Bp != B:
        outT = outT[:, :B]
    return outT.T                                   # (B, n_out)


def _reference(x, w1, b1, w2, b2):
    h = jnp.maximum(x @ w1.T + b1, 0.0)
    logits = h @ w2.T + b2
    return jax.nn.softmax(logits, axis=1)


if __name__ == "__main__":
    # Shapes implied by the module: Policy(n_in=4, n_mid=32, n_out=8).
    B, n_in, n_mid, n_out = 2, 4, 32, 8

    key = jax.random.PRNGKey(0)
    kx, kw1, kw2 = jax.random.split(key, 3)

    x = jax.random.normal(kx, (B, n_in), dtype=jnp.float32)

    # Deterministic init matching Policy.init(): normal(0, 0.1) weights,
    # zero biases (PyTorch (out_features, in_features) layout).
    w1 = 0.1 * jax.random.normal(kw1, (n_mid, n_in), dtype=jnp.float32)
    b1 = jnp.zeros((n_mid,), dtype=jnp.float32)
    w2 = 0.1 * jax.random.normal(kw2, (n_out, n_mid), dtype=jnp.float32)
    b2 = jnp.zeros((n_out,), dtype=jnp.float32)

    # Hoisted one-time parameter preparation (bias reshapes only).
    params = prepare_policy_params(w1, b1, w2, b2)

    # 1) Base case at the module's implied small shapes.
    action = jax.block_until_ready(policy_forward(x, params))
    ref = _reference(x, w1, b1, w2, b2)
    assert action.shape == (B, n_out)
    assert jnp.allclose(action, ref, atol=2e-3, rtol=2e-3)
    assert jnp.allclose(jnp.sum(action, axis=1), 1.0, atol=1e-5)

    # 2) Exercise the multi-block grid path + batch padding (still small).
    xb = jax.random.normal(jax.random.PRNGKey(1), (300, n_in), dtype=jnp.float32)
    act_b = jax.block_until_ready(policy_forward(xb, params, max_batch_tile=128))
    ref_b = _reference(xb, w1, b1, w2, b2)
    assert act_b.shape == (300, n_out)
    assert jnp.allclose(act_b, ref_b, atol=2e-3, rtol=2e-3)
    assert jnp.allclose(jnp.sum(act_b, axis=1), 1.0, atol=1e-5)

    # TODO(synk): fit()/optimizer/loss_fn are training-side state and are not
    # part of the forward pass; only forward() is implemented here.
    print("KERNEL_OK")
</pallas_src>

<mosaic_0001>
module attributes {stable_mosaic.version = 11 : i64} {
  func.func @_policy_kernel(%arg0: i32, %arg1: memref<4x2xf32, #tpu.memory_space<vmem>>, %arg2: memref<32x4xf32, #tpu.memory_space<vmem>>, %arg3: memref<32x1xf32, #tpu.memory_space<vmem>>, %arg4: memref<8x32xf32, #tpu.memory_space<vmem>>, %arg5: memref<8x1xf32, #tpu.memory_space<vmem>>, %arg6: memref<8x2xf32, #tpu.memory_space<vmem>>) attributes {dimension_semantics = [#tpu.dimension_semantics<parallel>], iteration_bounds = array<i64: 1>, scalar_prefetch = 0 : i64, scratch_operands = 0 : i64, tpu.core_type = #tpu.core_type<tc>, window_params = [{transform_indices = @transform_0, window_bounds = array<i64: 4, 2>}, {pipeline_mode = #tpu.pipeline_mode<synchronous>, transform_indices = @transform_1, window_bounds = array<i64: 32, 4>}, {pipeline_mode = #tpu.pipeline_mode<synchronous>, transform_indices = @transform_2, window_bounds = array<i64: 32, 1>}, {pipeline_mode = #tpu.pipeline_mode<synchronous>, transform_indices = @transform_3, window_bounds = array<i64: 8, 32>}, {pipeline_mode = #tpu.pipeline_mode<synchronous>, transform_indices = @transform_4, window_bounds = array<i64: 8, 1>}, {transform_indices = @transform_5, window_bounds = array<i64: 8, 2>}]} {
    %c0 = arith.constant 0 : index
    %c0_0 = arith.constant 0 : index
    %0 = vector.load %arg1[%c0, %c0_0] : memref<4x2xf32, #tpu.memory_space<vmem>>, vector<4x2xf32>
    %c0_1 = arith.constant 0 : index
    %c0_2 = arith.constant 0 : index
    %1 = vector.load %arg2[%c0_1, %c0_2] : memref<32x4xf32, #tpu.memory_space<vmem>>, vector<32x4xf32>
    %cst = arith.constant dense<0.000000e+00> : vector<32x2xf32>
    %2 = tpu.matmul %1, %0, %cst {dimension_numbers = #tpu.dot_dimension_numbers<[1], [0], [0], [1], [0, 0, 1, 1], [], []>} : vector<32x4xf32>, vector<4x2xf32>, vector<32x2xf32> -> vector<32x2xf32>
    %c0_3 = arith.constant 0 : index
    %c0_4 = arith.constant 0 : index
    %3 = vector.load %arg3[%c0_3, %c0_4] : memref<32x1xf32, #tpu.memory_space<vmem>>, vector<32x1xf32>
    %4 = vector.broadcast %3 : vector<32x1xf32> to vector<32x2xf32>
    %5 = arith.addf %2, %4 : vector<32x2xf32>
    %cst_5 = arith.constant 0.000000e+00 : f32
    %6 = vector.broadcast %cst_5 : f32 to vector<32x2xf32>
    %7 = arith.maximumf %5, %6 : vector<32x2xf32>
    %c0_6 = arith.constant 0 : index
    %c0_7 = arith.constant 0 : index
    %8 = vector.load %arg4[%c0_6, %c0_7] : memref<8x32xf32, #tpu.memory_space<vmem>>, vector<8x32xf32>
    %cst_8 = arith.constant dense<0.000000e+00> : vector<8x2xf32>
    %9 = tpu.matmul %8, %7, %cst_8 {dimension_numbers = #tpu.dot_dimension_numbers<[1], [0], [0], [1], [0, 0, 1, 1], [], []>} : vector<8x32xf32>, vector<32x2xf32>, vector<8x2xf32> -> vector<8x2xf32>
    %c0_9 = arith.constant 0 : index
    %c0_10 = arith.constant 0 : index
    %10 = vector.load %arg5[%c0_9, %c0_10] : memref<8x1xf32, #tpu.memory_space<vmem>>, vector<8x1xf32>
    %11 = vector.broadcast %10 : vector<8x1xf32> to vector<8x2xf32>
    %12 = arith.addf %9, %11 : vector<8x2xf32>
    %cst_11 = arith.constant dense<0xFF800000> : vector<2xf32>
    %13 = vector.multi_reduction <maximumf>, %12, %cst_11 [0] : vector<8x2xf32> to vector<2xf32>
    %14 = vector.shape_cast %13 : vector<2xf32> to vector<1x2xf32>
    %15 = vector.broadcast %14 : vector<1x2xf32> to vector<8x2xf32>
    %16 = arith.subf %12, %15 : vector<8x2xf32>
    %17 = math.exp %16 : vector<8x2xf32>
    %cst_12 = arith.constant dense<0.000000e+00> : vector<2xf32>
    %18 = vector.multi_reduction <add>, %17, %cst_12 [0] : vector<8x2xf32> to vector<2xf32>
    %19 = vector.shape_cast %18 : vector<2xf32> to vector<1x2xf32>
    %20 = vector.broadcast %19 : vector<1x2xf32> to vector<8x2xf32>
    %21 = arith.divf %17, %20 : vector<8x2xf32>
    %c0_13 = arith.constant 0 : index
    %c0_14 = arith.constant 0 : index
    %22 = vector.load %arg6[%c0_13, %c0_14] : memref<8x2xf32, #tpu.memory_space<vmem>>, vector<8x2xf32>
    tpu.vector_store %arg6[%c0_13, %c0_14], %21 {strides = array<i32>} : memref<8x2xf32, #tpu.memory_space<vmem>>, vector<8x2xf32>,
    return
  }
  func.func @transform_0(%arg0: i32) -> (i32, i32) {
    %c0_i32 = arith.constant 0 : i32
    %c0_i32_0 = arith.constant 0 : i32
    return %c0_i32, %arg0 : i32, i32
  }
  func.func @transform_1(%arg0: i32) -> (i32, i32) {
    %c0_i32 = arith.constant 0 : i32
    %c0_i32_0 = arith.constant 0 : i32
    %c0_i32_1 = arith.constant 0 : i32
    return %c0_i32, %c0_i32_0 : i32, i32
  }
  func.func @transform_2(%arg0: i32) -> (i32, i32) {
    %c0_i32 = arith.constant 0 : i32
    %c0_i32_0 = arith.constant 0 : i32
    %c0_i32_1 = arith.constant 0 : i32
    return %c0_i32, %c0_i32_0 : i32, i32
  }
  func.func @transform_3(%arg0: i32) -> (i32, i32) {
    %c0_i32 = arith.constant 0 : i32
    %c0_i32_0 = arith.constant 0 : i32
    %c0_i32_1 = arith.constant 0 : i32
    return %c0_i32, %c0_i32_0 : i32, i32
  }
  func.func @transform_4(%arg0: i32) -> (i32, i32) {
    %c0_i32 = arith.constant 0 : i32
    %c0_i32_0 = arith.constant 0 : i32
    %c0_i32_1 = arith.constant 0 : i32
    return %c0_i32, %c0_i32_0 : i32, i32
  }
  func.func @transform_5(%arg0: i32) -> (i32, i32) {
    %c0_i32 = arith.constant 0 : i32
    %c0_i32_0 = arith.constant 0 : i32
    return %c0_i32, %arg0 : i32, i32
  }
}

</mosaic_0001>

<llo_original>
// kernel: tpu_custom_call.1
$region0: #{tpu_custom_call.1}
  #allocation0 [shape = 'u32[]', space=smem, size = 0x4, offset = 0x4, fixed_abs, tag = 'smem constant byte address 0x4 - core index']
  #allocation1 [shape = 'u32[144,128]{1,0:T(1,128)}', space=vmem, size = 0x12000, scoped, tag = 'internal scratch']
  %s0 = inlined_call_operand.vmem [shape: f32[4,2], index: 0, kind: input, shape index: {}]
  %s1 = inlined_call_operand.vmem [shape: f32[32,4], index: 1, kind: input, shape index: {}]
  %s2 = inlined_call_operand.vmem [shape: f32[32,1], index: 2, kind: input, shape index: {}]
  %s3 = inlined_call_operand.vmem [shape: f32[8,32], index: 3, kind: input, shape index: {}]
  %s4 = inlined_call_operand.vmem [shape: f32[8,1], index: 4, kind: input, shape index: {}]
  %s5 = inlined_call_operand.vmem [shape: f32[8,2], index: 5, kind: output, shape index: {}]
  %s6 = sld [smem:[#allocation0]]
  $region30: #{tpu_custom_call.1} parent=0
    _
  %s8 = ssub.s32 1, %s6
  %s9 = scalar_select 0, %s8, %s6
  // Predicated region
  $region2: #{tpu_custom_call.1} parent=0 // pred_check
    _
  $region3: #{tpu_custom_call.1} parent=0 // pred_check_branch
    %11 = sbr.rel (0) target = $region5
  $region4: #{tpu_custom_call.1} parent=0 // pred_region
    _
  $region5: #{tpu_custom_call.1} parent=0 // pred_fallthru
    _
  // Predicated region
  $region6: #{tpu_custom_call.1} parent=0 // pred_check
    _
  $region7: #{tpu_custom_call.1} parent=0 // pred_check_branch
    %13 = sbr.rel (0) target = $region9
  $region8: #{tpu_custom_call.1} parent=0 // pred_region
    _
  $region9: #{tpu_custom_call.1} parent=0 // pred_fallthru
    _
  // Predicated region
  $region10: #{tpu_custom_call.1} parent=0 // pred_check
    _
  $region11: #{tpu_custom_call.1} parent=0 // pred_check_branch
    %15 = sbr.rel (0) target = $region13
  $region12: #{tpu_custom_call.1} parent=0 // pred_region
    _
  $region13: #{tpu_custom_call.1} parent=0 // pred_fallthru
    _
  // Predicated region
  $region14: #{tpu_custom_call.1} parent=0 // pred_check
    _
  $region15: #{tpu_custom_call.1} parent=0 // pred_check_branch
    %17 = sbr.rel (0) target = $region17
  $region16: #{tpu_custom_call.1} parent=0 // pred_region
    _
  $region17: #{tpu_custom_call.1} parent=0 // pred_fallthru
    _
  // Predicated region
  $region18: #{tpu_custom_call.1} parent=0 // pred_check
    _
  $region19: #{tpu_custom_call.1} parent=0 // pred_check_branch
    %19 = sbr.rel (0) target = $region21
  $region20: #{tpu_custom_call.1} parent=0 // pred_region
    _
  $region21: #{tpu_custom_call.1} parent=0 // pred_fallthru
    _
  %v20 = vld [vmem:[%s0] sm:$0xf]
  %v21 = vld [vmem:[%s1] sm:$0xff]
  %v22 = vld [vmem:[%s1 + $0x8] sm:$0xff]
  %v23 = vld [vmem:[%s1 + $0x10] sm:$0xff]
  %v24 = vld [vmem:[%s1 + $0x18] sm:$0xff]
  %v25 = vld [vmem:[%s2] sm:$0xff]
  %v26 = vld [vmem:[%s2 + $0x8] sm:$0xff]
  %v27 = vld [vmem:[%s2 + $0x10] sm:$0xff]
  %v28 = vld [vmem:[%s2 + $0x18] sm:$0xff]
  %30 = vset.pattern.permute.xlu0 0
  %31 = vperm.xlu0 %30, %v25
  %v32 = vpop.permute.xlu0 %31
  %35 = vset.pattern.permute.xlu0 0
  %36 = vperm.xlu0 %35, %v26
  %v37 = vpop.permute.xlu0 %36
  %40 = vset.pattern.permute.xlu0 0
  %41 = vperm.xlu0 %40, %v27
  %v42 = vpop.permute.xlu0 %41
  %45 = vset.pattern.permute.xlu0 0
  %46 = vperm.xlu0 %45, %v28
  %v47 = vpop.permute.xlu0 %46
  %vm49 = vcmask 31744
  %v51 = vsel %vm49, %v21, 0
  %v54 = vsel %vm49, %v22, 0
  %v57 = vsel %vm49, %v23, 0
  %v60 = vsel %vm49, %v24, 0
  %vm62 = vcmask 1043456
  %v64 = vsel %vm62, %v20, 0
  %66 = vmatprep.subr.mxu0 0.0
  %67 = vmatpush1.msra.mxu0 %v64
  %68 = vmatprep.subr.mxu0 0.0
  %69 = vmatpush1.msra.mxu0 0.0
  %70 = vmatprep.subr.mxu0 0.0
  %71 = vmatpush1.msra.mxu0 0.0
  %72 = vmatprep.subr.mxu0 0.0
  %73 = vmatpush1.msra.mxu0 0.0
  %74 = vmatprep.subr.mxu0 0.0
  %75 = vmatpush1.msra.mxu0 0.0
  %76 = vmatprep.subr.mxu0 0.0
  %77 = vmatpush1.msra.mxu0 0.0
  %78 = vmatprep.subr.mxu0 0.0
  %79 = vmatpush1.msra.mxu0 0.0
  %80 = vmatprep.subr.mxu0 0.0
  %81 = vmatpush1.msra.mxu0 0.0
  %82 = vmatprep.subr.mxu0 0.0
  %83 = vmatpush1.msra.mxu0 0.0
  %84 = vmatprep.subr.mxu0 0.0
  %85 = vmatpush1.msra.mxu0 0.0
  %86 = vmatprep.subr.mxu0 0.0
  %87 = vmatpush1.msra.mxu0 0.0
  %88 = vmatprep.subr.mxu0 0.0
  %89 = vmatpush1.msra.mxu0 0.0
  %90 = vmatprep.subr.mxu0 0.0
  %91 = vmatpush1.msra.mxu0 0.0
  %92 = vmatprep.subr.mxu0 0.0
  %93 = vmatpush1.msra.mxu0 0.0
  %94 = vmatprep.subr.mxu0 0.0
  %95 = vmatpush1.msra.mxu0 0.0
  %96 = vmatprep.subr.mxu0 0.0
  %97 = vmatpush1.msra.mxu0 0.0
  %98 = vmatprep.subr.mxu0 0.0
  %99 = vmatpush1.msra.mxu0 0.0
  %100 = vmatprep.subr.mxu0 0.0
  %101 = vmatpush1.msra.mxu0 0.0
  %102 = vmatprep.subr.mxu0 0.0
  %103 = vmatpush1.msra.mxu0 0.0
  %104 = vmatprep.subr.mxu0 0.0
  %105 = vmatpush1.msra.mxu0 0.0
  %106 = vmatprep.subr.mxu0 0.0
  %107 = vmatpush1.msra.mxu0 0.0
  %108 = vmatprep.subr.mxu0 0.0
  %109 = vmatpush1.msra.mxu0 0.0
  %110 = vmatprep.subr.mxu0 0.0
  %111 = vmatpush1.msra.mxu0 0.0
  %112 = vmatprep.subr.mxu0 0.0
  %113 = vmatpush1.msra.mxu0 0.0
  %114 = vmatprep.subr.mxu0 0.0
  %115 = vmatpush1.msra.mxu0 0.0
  %116 = vmatprep.subr.mxu0 0.0
  %117 = vmatpush1.msra.mxu0 0.0
  %118 = vmatprep.subr.mxu0 0.0
  %119 = vmatpush1.msra.mxu0 0.0
  %120 = vmatprep.subr.mxu0 0.0
  %121 = vmatpush1.msra.mxu0 0.0
  %122 = vmatprep.subr.mxu0 0.0
  %123 = vmatpush1.msra.mxu0 0.0
  %124 = vmatprep.subr.mxu0 0.0
  %125 = vmatpush1.msra.mxu0 0.0
  %126 = vmatprep.subr.mxu0 0.0
  %127 = vmatpush1.msra.mxu0 0.0
  %128 = vmatprep.subr.mxu0 0.0
  %129 = vmatpush1.msra.mxu0 0.0
  %130 = vmatprep.mubr.f32.mxu0 0.0
  %131 = vmatmul.mubr.f32.gmra.mrb[0].mxu0 %v51
  %v132 = vpop.f32.mrb[0].mxu0
  %v133 = vadd.f32 %v32, %v132
  %v134 = vpop.f32.mrb[0].mxu0
  %135 = vmatprep.mubr.f32.mxu0 0.0
  %136 = vmatmul.mubr.f32.gmra.mrb[0].mxu0 %v54
  %v137 = vpop.f32.mrb[0].mxu0
  %v138 = vadd.f32 %v37, %v137
  %v139 = vpop.f32.mrb[0].mxu0
  %140 = vmatprep.mubr.f32.mxu0 0.0
  %141 = vmatmul.mubr.f32.gmra.mrb[0].mxu0 %v57
  %v142 = vpop.f32.mrb[0].mxu0
  %v143 = vadd.f32 %v42, %v142
  %v144 = vpop.f32.mrb[0].mxu0
  %145 = vmatprep.mubr.f32.mxu0 0.0
  %146 = vmatmul.mubr.f32.gmra.mrb[0].mxu0 %v60
  %v147 = vpop.f32.mrb[0].mxu0
  %v148 = vadd.f32 %v47, %v147
  %v149 = vpop.f32.mrb[0].mxu0
  %150 = vdwg.mxu0
  %v151 = vmax.f32 %v133, 0.0
  %v152 = vmax.f32 %v138, 0.0
  %v153 = vmax.f32 %v143, 0.0
  %v154 = vmax.f32 %v148, 0.0
  %v155 = vld [vmem:[%s3] sm:$0xff]
  %v156 = vld [vmem:[%s4] sm:$0xff]
  %158 = vset.pattern.permute.xlu0 0
  %159 = vperm.xlu0 %158, %v156
  %v160 = vpop.permute.xlu0 %159
  %vm162 = vcmask 261120
  %v164 = vsel %vm162, %v155, 0
  %166 = vmatprep.subr.mxu0 0.0
  %167 = vmatpush1.msra.mxu0 %v151
  %168 = vmatprep.subr.mxu0 0.0
  %169 = vmatpush1.msra.mxu0 %v152
  %170 = vmatprep.subr.mxu0 0.0
  %171 = vmatpush1.msra.mxu0 %v153
  %172 = vmatprep.subr.mxu0 0.0
  %173 = vmatpush1.msra.mxu0 %v154
  %174 = vmatprep.subr.mxu0 0.0
  %175 = vmatpush1.msra.mxu0 0.0
  %176 = vmatprep.subr.mxu0 0.0
  %177 = vmatpush1.msra.mxu0 0.0
  %178 = vmatprep.subr.mxu0 0.0
  %179 = vmatpush1.msra.mxu0 0.0
  %180 = vmatprep.subr.mxu0 0.0
  %181 = vmatpush1.msra.mxu0 0.0
  %182 = vmatprep.subr.mxu0 0.0
  %183 = vmatpush1.msra.mxu0 0.0
  %184 = vmatprep.subr.mxu0 0.0
  %185 = vmatpush1.msra.mxu0 0.0
  %186 = vmatprep.subr.mxu0 0.0
  %187 = vmatpush1.msra.mxu0 0.0
  %188 = vmatprep.subr.mxu0 0.0
  %189 = vmatpush1.msra.mxu0 0.0
  %190 = vmatprep.subr.mxu0 0.0
  %191 = vmatpush1.msra.mxu0 0.0
  %192 = vmatprep.subr.mxu0 0.0
  %193 = vmatpush1.msra.mxu0 0.0
  %194 = vmatprep.subr.mxu0 0.0
  %195 = vmatpush1.msra.mxu0 0.0
  %196 = vmatprep.subr.mxu0 0.0
  %197 = vmatpush1.msra.mxu0 0.0
  %198 = vmatprep.subr.mxu0 0.0
  %199 = vmatpush1.msra.mxu0 0.0
  %200 = vmatprep.subr.mxu0 0.0
  %201 = vmatpush1.msra.mxu0 0.0
  %202 = vmatprep.subr.mxu0 0.0
  %203 = vmatpush1.msra.mxu0 0.0
  %204 = vmatprep.subr.mxu0 0.0
  %205 = vmatpush1.msra.mxu0 0.0
  %206 = vmatprep.subr.mxu0 0.0
  %207 = vmatpush1.msra.mxu0 0.0
  %208 = vmatprep.subr.mxu0 0.0
  %209 = vmatpush1.msra.mxu0 0.0
  %210 = vmatprep.subr.mxu0 0.0
  %211 = vmatpush1.msra.mxu0 0.0
  %212 = vmatprep.subr.mxu0 0.0
  %213 = vmatpush1.msra.mxu0 0.0
  %214 = vmatprep.subr.mxu0 0.0
  %215 = vmatpush1.msra.mxu0 0.0
  %216 = vmatprep.subr.mxu0 0.0
  %217 = vmatpush1.msra.mxu0 0.0
  %218 = vmatprep.subr.mxu0 0.0
  %219 = vmatpush1.msra.mxu0 0.0
  %220 = vmatprep.subr.mxu0 0.0
  %221 = vmatpush1.msra.mxu0 0.0
  %222 = vmatprep.subr.mxu0 0.0
  %223 = vmatpush1.msra.mxu0 0.0
  %224 = vmatprep.subr.mxu0 0.0
  %225 = vmatpush1.msra.mxu0 0.0
  %226 = vmatprep.subr.mxu0 0.0
  %227 = vmatpush1.msra.mxu0 0.0
  %228 = vmatprep.subr.mxu0 0.0
  %229 = vmatpush1.msra.mxu0 0.0
  %230 = vmatprep.mubr.f32.mxu0 0.0
  %231 = vmatmul.mubr.f32.gmra.mrb[0].mxu0 %v164
  %v232 = vpop.f32.mrb[0].mxu0
  %v233 = vadd.f32 %v160, %v232
  %v234 = vpop.f32.mrb[0].mxu0
  %235 = vdwg.mxu0
  %vm236 = vcmask 15360
  %v237 = vsel %vm236, %v233, -inf
  %v238 = vrot.slane %v237, 4
  %v239 = vmax.f32 %v237, %v238
  %v240 = vrot.slane %v239, 2
  %v241 = vmax.f32 %v239, %v240
  %v242 = vrot.slane %v241, 1
  %v243 = vmax.f32 %v241, %v242
  %v244 = vsub.f32 %v233, %v243
  %v245 = vmul.f32 %v244, 1.442695
  %v246 = vpow.pop %v245
  %v247 = vsel %vm236, %v246, 0.0
  %v248 = vrot.slane %v247, 4
  %v249 = vadd.f32 %v247, %v248
  %v250 = vrot.slane %v249, 2
  %v251 = vadd.f32 %v249, %v250
  %v252 = vrot.slane %v251, 1
  %v253 = vadd.f32 %v251, %v252
  %v254 = vrcp.pop %v253
  %v255 = vmul.f32 %v246, %v254
  %256 = vst.msk [vmem:[%s5] sm:$0xff] %vm236, %v255
  // Predicated region
  $region22: #{tpu_custom_call.1} parent=0 // pred_check
    _
  $region23: #{tpu_custom_call.1} parent=0 // pred_check_branch
    %258 = sbr.rel (0) target = $region25
  $region24: #{tpu_custom_call.1} parent=0 // pred_region
    _
  $region25: #{tpu_custom_call.1} parent=0 // pred_fallthru
    _
  // Predicated region
  $region26: #{tpu_custom_call.1} parent=0 // pred_check
    _
  $region27: #{tpu_custom_call.1} parent=0 // pred_check_branch
    %260 = sbr.rel (0) target = $region29
  $region28: #{tpu_custom_call.1} parent=0 // pred_region
    _
  $region29: #{tpu_custom_call.1} parent=0 // pred_fallthru
    _

</llo_original>
